<compile_context>
chip_gen: v6e
topology: v6e:2x2x1
jax: 0.10.0
libtpu: 0.0.40
codegen_flags: <defaults>
</compile_context>

<pallas_src>
import functools

import jax
import jax.numpy as jnp
from jax import lax
from jax.experimental import pallas as pl
from jax.experimental.pallas import tpu as pltpu


_LANE = 128
_VMEM_BUDGET = 40 * 1024 * 1024    # conservative across v5e/v6e (128 MiB) and v7x (64 MiB/TC)
_X_TILE_TARGET = 2 * 1024 * 1024   # ~2 MiB per x buffer -> near HBM roofline per measurements


def _round_up(x, n):
    return ((x + n - 1) // n) * n


def _sublane_multiple(itemsize):
    # 8 for f32, 16 for bf16, 32 for 8-bit (sub-32-bit dtypes pack along sublanes)
    return max(8, 32 // itemsize)


def _mlp_tanh_kernel(x_ref, w1_ref, o_ref, *, inv_m, tanh_dtype):
    """One (batch tile, hidden tile) step of: out = mean_m tanh(x @ W1.T).

    x_ref  : [TB, d]  streamed batch tile (resident across the m axis)
    w1_ref : [TM, d]  fc1 weight slab (whole W1 when it fits VMEM)
    o_ref  : [1, TB]  lane-dense output row, accumulated across the m axis
    """
    # Zero the resident output block at the start of the hidden-dim reduction.
    @pl.when(pl.program_id(1) == 0)
    def _():
        o_ref[...] = jnp.zeros_like(o_ref)

    # fc1 on the MXU: contract the shared feature axis d directly,
    # (TM, d) . (TB, d) -> (TM, TB); batch lands on the lane axis so tanh and
    # the reduction below run on full-width vregs. (If a per-step vxpose of
    # the x operand ever shows up on the critical path, flip to x @ W1.T —
    # the output writeback here is tiny either way.)
    h = lax.dot_general(
        w1_ref[...], x_ref[...],
        dimension_numbers=(((1,), (1,)), ((), ())),
        preferred_element_type=jnp.float32,
    )

    # tanh on the EUP. tanh_dtype=bf16 doubles EUP throughput on v6e/v7x
    # (the saturated slot for small d); keep f32 on v5e (no bf16 EUP).
    z = jnp.tanh(h.astype(tanh_dtype)).astype(jnp.float32)

    # fc2 with fixed 1/m * ones weights == mean over hidden units. Output
    # width 1 is a pathological MXU shape, so use a sublane reduction + scalar
    # scale instead of a matmul (and no per-element w2 multiply at all).
    o_ref[...] += inv_m * jnp.sum(z, axis=0, keepdims=True)


def one_hidden_layer_tanh(x, w1, *, block_b=None, block_m=None,
                          compute_dtype=None, tanh_dtype=None):
    """
    x  : [B, d] float32   (batch, features)
    w1 : [m, d] float32   (PyTorch fc1.weight layout)
    returns: [B] float32  == tanh(x @ w1.T) @ (1/m * ones(m))

    block_b       : batch tile (auto: ~2 MiB x-tile, >=2 grid steps when possible)
    block_m       : hidden tile (auto: whole W1 if it fits ~half the VMEM budget)
    compute_dtype : e.g. jnp.bfloat16 — halves HBM traffic for x/W1 and is
                    MXU-native on v5e/v6e/v7x; accumulation stays f32.
    tanh_dtype    : e.g. jnp.bfloat16 on v6e/v7x (bf16 EUP); leave None (f32) on v5e.
    """
    B, d = x.shape
    m, d_w = w1.shape
    if d_w != d:
        raise ValueError(f"w1 shape {w1.shape} incompatible with x shape {x.shape}")
    inv_m = 1.0 / float(m)

    if compute_dtype is not None:
        x = x.astype(compute_dtype)
        w1 = w1.astype(compute_dtype)
    if tanh_dtype is None:
        tanh_dtype = jnp.float32
    x_isz = x.dtype.itemsize
    w_isz = w1.dtype.itemsize

    # ---- hidden-dim (m) tiling -------------------------------------------
    m_sub = _sublane_multiple(w_isz)
    if block_m is not None:
        tm = min(_round_up(min(block_m, m), m_sub), _round_up(m, m_sub))
    elif m * d * w_isz <= _VMEM_BUDGET // 2:
        tm = m                                        # whole W1 stays VMEM-resident
    else:
        tm = max(m_sub, ((_VMEM_BUDGET // 2) // (2 * d * w_isz)) // m_sub * m_sub)
        tm = min(tm, m)
    n_m = pl.cdiv(m, tm)
    m_pad = n_m * tm
    if m_pad != m:
        # zero hidden units contribute tanh(0) = 0 to the sum -> harmless
        w1 = jnp.pad(w1, ((0, m_pad - m), (0, 0)))

    # ---- batch (B) tiling --------------------------------------------------
    b_sub = _sublane_multiple(x_isz)
    if B < _LANE and block_b is None:
        tb = _round_up(B, b_sub)                      # single small (full-dim) tile
        n_b = 1
    else:
        if block_b is not None:
            tb = max(_LANE, (int(block_b) // _LANE) * _LANE)
        else:
            tb = max(_LANE, (_X_TILE_TARGET // (d * x_isz)) // _LANE * _LANE)
            # keep >= 2 batch steps when possible so the 'parallel' axis can
            # feed both TensorCores on v7x
            tb = min(tb, _round_up(pl.cdiv(B, 2), _LANE))
        # fit the double-buffered x tile alongside the W1 buffers in VMEM
        w1_vmem = (1 if n_m == 1 else 2) * tm * d * w_isz
        x_budget = max(_VMEM_BUDGET - w1_vmem, 4 * _LANE * d * x_isz)
        tb = min(tb, max(_LANE, (x_budget // (2 * d * x_isz)) // _LANE * _LANE))
        n_b = pl.cdiv(B, tb)
    b_pad = n_b * tb
    if b_pad != B:
        # zero-padded rows give tanh(0)=0 sums and are sliced off below
        x = jnp.pad(x, ((0, b_pad - B), (0, 0)))

    # ---- VMEM limit (re-derived per tiling; v7x has only 64 MiB/TC) -------
    w1_bufs = 1 if n_m == 1 else 2
    vmem_needed = 2 * tb * d * x_isz + w1_bufs * tm * d * w_isz + 2 * tb * 4
    vmem_limit = int(min(56 << 20, max(32 << 20, vmem_needed * 5 // 4 + (2 << 20))))

    # ---- specs --------------------------------------------------------------
    x_spec = pl.BlockSpec((tb, d), lambda i, k: (i, 0))     # resident across m axis
    if n_m == 1:
        # constant index_map -> single VMEM copy, no double buffering
        w1_spec = pl.BlockSpec((tm, d), lambda i, k: (0, 0),
                               pipeline_mode=pl.Buffered(1))
    else:
        w1_spec = pl.BlockSpec((tm, d), lambda i, k: (k, 0))
    out_spec = pl.BlockSpec((1, tb), lambda i, k: (0, i))    # accumulator across m axis

    w1_reads = 1 if n_m == 1 else n_b
    cost = pl.CostEstimate(
        flops=2 * B * m * d + 2 * B * m,
        transcendentals=B * m,
        bytes_accessed=b_pad * d * x_isz + w1_reads * m_pad * d * w_isz + b_pad * 4,
    )

    kernel = functools.partial(_mlp_tanh_kernel, inv_m=inv_m, tanh_dtype=tanh_dtype)

    out = pl.pallas_call(
        kernel,
        out_shape=jax.ShapeDtypeStruct((1, b_pad), jnp.float32),
        grid_spec=pltpu.PrefetchScalarGridSpec(
            num_scalar_prefetch=0,
            grid=(n_b, n_m),                 # reduction (m) axis last
            in_specs=[x_spec, w1_spec],
            out_specs=out_spec,
        ),
        compiler_params=pltpu.CompilerParams(
            dimension_semantics=("parallel", "arbitrary"),
            vmem_limit_bytes=vmem_limit,
        ),
        cost_estimate=cost,
    )(x, w1)

    return out[0, :B]


if __name__ == "__main__":
    # Small deterministic example consistent with the module: d features,
    # m hidden units, batch B (several batch tiles to exercise the grid).
    B, d, m = 256, 16, 32
    key = jax.random.PRNGKey(0)
    kx, kw = jax.random.split(key)

    x = jax.random.normal(kx, (B, d), dtype=jnp.float32)

    # fc1: mimic nn.Linear default U(-1/sqrt(d), 1/sqrt(d)), bias=False
    bound = 1.0 / (float(d) ** 0.5)
    w1 = jax.random.uniform(kw, (m, d), minval=-bound, maxval=bound,
                            dtype=jnp.float32)

    # Plain-JAX reference of the PyTorch forward (fc2.weight = 1/m * ones(m)).
    ref = jnp.tanh(x @ w1.T) @ ((1.0 / m) * jnp.ones((m,), jnp.float32))

    # Path 1: W1 VMEM-resident (single-buffered), batch grid-tiled -> grid (2, 1).
    out = one_hidden_layer_tanh(x, w1)
    jax.block_until_ready(out)
    assert out.shape == (B,)
    assert jnp.allclose(out, ref, atol=1e-5, rtol=1e-5)

    # Path 2: hidden dim tiled with accumulation over the 'arbitrary' m axis
    # (the large-m configuration) -> grid (2, 2).
    out2 = one_hidden_layer_tanh(x, w1, block_b=128, block_m=16)
    jax.block_until_ready(out2)
    assert jnp.allclose(out2, ref, atol=1e-5, rtol=1e-5)

    print("KERNEL_OK")
</pallas_src>

<mosaic_0001>
module attributes {stable_mosaic.version = 11 : i64} {
  func.func @_mlp_tanh_kernel(%arg0: i32, %arg1: i32, %arg2: memref<128x16xf32, #tpu.memory_space<vmem>>, %arg3: memref<32x16xf32, #tpu.memory_space<vmem>>, %arg4: memref<1x128xf32, #tpu.memory_space<vmem>>) attributes {dimension_semantics = [#tpu.dimension_semantics<parallel>, #tpu.dimension_semantics<arbitrary>], iteration_bounds = array<i64: 2, 1>, scalar_prefetch = 0 : i64, scratch_operands = 0 : i64, tpu.core_type = #tpu.core_type<tc>, window_params = [{transform_indices = @transform_0, window_bounds = array<i64: 128, 16>}, {pipeline_mode = #tpu.pipeline_mode<synchronous>, transform_indices = @transform_1, window_bounds = array<i64: 32, 16>}, {transform_indices = @transform_2, window_bounds = array<i64: 1, 128>}]} {
    %c0_i32 = arith.constant 0 : i32
    %0 = arith.cmpi eq, %arg1, %c0_i32 : i32
    %1 = arith.extui %0 : i1 to i32
    %c0_i32_0 = arith.constant 0 : i32
    %2 = arith.cmpi ne, %1, %c0_i32_0 : i32
    scf.if %2 {
      %cst_10 = arith.constant 0.000000e+00 : f32
      %14 = vector.broadcast %cst_10 : f32 to vector<1x128xf32>
      %c0_11 = arith.constant 0 : index
      %c0_12 = arith.constant 0 : index
      %15 = vector.load %arg4[%c0_11, %c0_12] : memref<1x128xf32, #tpu.memory_space<vmem>>, vector<1x128xf32>
      tpu.vector_store %arg4[%c0_11, %c0_12], %14 {strides = array<i32>} : memref<1x128xf32, #tpu.memory_space<vmem>>, vector<1x128xf32>,
    } else {
    }
    %c0 = arith.constant 0 : index
    %c0_1 = arith.constant 0 : index
    %3 = vector.load %arg3[%c0, %c0_1] : memref<32x16xf32, #tpu.memory_space<vmem>>, vector<32x16xf32>
    %c0_2 = arith.constant 0 : index
    %c0_3 = arith.constant 0 : index
    %4 = vector.load %arg2[%c0_2, %c0_3] : memref<128x16xf32, #tpu.memory_space<vmem>>, vector<128x16xf32>
    %cst = arith.constant dense<0.000000e+00> : vector<32x128xf32>
    %5 = tpu.matmul %3, %4, %cst {dimension_numbers = #tpu.dot_dimension_numbers<[1], [1], [0], [0], [0, 0, 1, 0], [], []>} : vector<32x16xf32>, vector<128x16xf32>, vector<32x128xf32> -> vector<32x128xf32>
    %6 = math.tanh %5 : vector<32x128xf32>
    %c0_4 = arith.constant 0 : index
    %c0_5 = arith.constant 0 : index
    %7 = vector.load %arg4[%c0_4, %c0_5] : memref<1x128xf32, #tpu.memory_space<vmem>>, vector<1x128xf32>
    %cst_6 = arith.constant dense<0.000000e+00> : vector<128xf32>
    %8 = vector.multi_reduction <add>, %6, %cst_6 [0] : vector<32x128xf32> to vector<128xf32>
    %9 = vector.shape_cast %8 : vector<128xf32> to vector<1x128xf32>
    %cst_7 = arith.constant 3.125000e-02 : f32
    %10 = vector.broadcast %cst_7 : f32 to vector<1x128xf32>
    %11 = arith.mulf %10, %9 : vector<1x128xf32>
    %12 = arith.addf %7, %11 : vector<1x128xf32>
    %c0_8 = arith.constant 0 : index
    %c0_9 = arith.constant 0 : index
    %13 = vector.load %arg4[%c0_8, %c0_9] : memref<1x128xf32, #tpu.memory_space<vmem>>, vector<1x128xf32>
    tpu.vector_store %arg4[%c0_8, %c0_9], %12 {strides = array<i32>} : memref<1x128xf32, #tpu.memory_space<vmem>>, vector<1x128xf32>,
    return
  }
  func.func @transform_0(%arg0: i32, %arg1: i32) -> (i32, i32) {
    %c0_i32 = arith.constant 0 : i32
    %c0_i32_0 = arith.constant 0 : i32
    return %arg0, %c0_i32 : i32, i32
  }
  func.func @transform_1(%arg0: i32, %arg1: i32) -> (i32, i32) {
    %c0_i32 = arith.constant 0 : i32
    %c0_i32_0 = arith.constant 0 : i32
    %c0_i32_1 = arith.constant 0 : i32
    return %c0_i32, %c0_i32_0 : i32, i32
  }
  func.func @transform_2(%arg0: i32, %arg1: i32) -> (i32, i32) {
    %c0_i32 = arith.constant 0 : i32
    %c0_i32_0 = arith.constant 0 : i32
    return %c0_i32, %arg0 : i32, i32
  }
}

</mosaic_0001>

<llo_original>
// kernel: tpu_custom_call.1
$region0: #{tpu_custom_call.1}
  #allocation0 [shape = 'u32[]', space=smem, size = 0x4, offset = 0x4, fixed_abs, tag = 'smem constant byte address 0x4 - core index']
  #allocation1 [shape = 'u32[144,128]{1,0:T(1,128)}', space=vmem, size = 0x12000, scoped, tag = 'internal scratch']
  %s0 = inlined_call_operand.vmem [shape: f32[256,16], index: 0, kind: input, shape index: {}]
  %s1 = inlined_call_operand.vmem [shape: f32[32,16], index: 1, kind: input, shape index: {}]
  %s2 = inlined_call_operand.hbm [shape: f32[1,256], index: 2, kind: output, shape index: {}]
  %s3 = sld [smem:[#allocation0]]
  $region45: #{tpu_custom_call.1} parent=0
    _
  %s5 = ssub.s32 1, %s3
  %s6 = scalar_select 0, %s5, %s3
  $region1: #{tpu_custom_call.1} parent=0
    #allocation2 [shape = 'u8[1024]{0}', space=vmem, size = 0x400, scoped, tag = 'output window, operand 0']
    #allocation3 [shape = 's32[2]{0}', space=sflag, size = 0x8, scoped, tag = 'scoped memory for tpu_custom_call.1']
    %7 = vsyncpa [#allocation3], 0
    %s8 = scalar_lea.sflag [#allocation3], 1
    %9 = vsyncpa %s8, 0
    loop: start=0, step=1, limit=4
    $region2: #{tpu_custom_call.1} parent=1 // loop_pre_header
      _
    $region3: #{tpu_custom_call.1} parent=1 // loop_header
      %s11 = sphi 0, %s15
      %p12 = scmp.ge.s32.totalorder %s11, 4
      %s18 = sphi 0, %s30
      %s19 = sphi 0, %s26
      %s20 = sphi 0, %s18
      %s21 = sphi 0, %s19
      %s22 = sphi 0, %s20
      %s23 = sphi 0, %s21
      %s33 = sphi 0, %s35
      %s36 = sphi 0, %s33
      %s37 = sphi 0, %s36
      %s53 = sphi 0, %s37
      %s57 = sphi 0, %s57
      %s59 = sphi 0, %s57
      %s60 = sphi 0, %s59
      %s74 = sphi 0, %s60
      %s80 = sphi 0, %s82
      %s83 = sphi 0, %s80
      %s84 = sphi 0, %s83
      %s100 = sphi 0, %s84
    $region4: #{tpu_custom_call.1} parent=1 // loop_header_branch
      %14 = sbr.rel (%p12) target = $region8
    $region5: #{tpu_custom_call.1} parent=1 // loop_body
      %s16 = ssub.s32 %s11, 1
      %s17 = ssub.s32 %s11, 2
      %s24 = sadd.s32 1, %s19
      %p25 = scmp.ge.s32.totalorder %s24, 1
      %s26 = scalar_select %p25, 0, %s24
      %s27 = sadd.s32 1, %s18
      %s28 = scalar_select %p25, %s27, %s18
      %p29 = scmp.ge.s32.totalorder %s28, 2
      %s30 = scalar_select %p29, 0, %s28
      %s31 = ssub.s32 %s18, %s30
      %p32 = scmp.eq.s32.totalorder %s31, 0
      %s34 = sadd.s32 %s33, 1
      %s35 = scalar_select %p32, %s33, %s34
      %p38 = pneg %p32
      %p39 = scmp.eq.s32.totalorder %s11, 1
      %p40 = por %p38, %p39
      %p41 = scmp.ne.s32.totalorder %s33, %s36
      %p42 = scmp.eq.s32.totalorder %s11, 0
      %p43 = por %p41, %p42
      %p44 = scmp.ne.s32.totalorder %s33, %s36
      %p45 = scmp.eq.s32.totalorder %s16, 1
      %p46 = por %p44, %p45
      %p47 = scmp.ne.s32.totalorder %s36, %s37
      %p48 = scmp.eq.s32.totalorder %s16, 0
      %p49 = por %p47, %p48
      %p50 = scmp.ne.s32.totalorder %s36, %s37
      %p51 = scmp.eq.s32.totalorder %s17, 1
      %p52 = por %p50, %p51
      %p54 = scmp.ne.s32.totalorder %s37, %s53
      %p55 = scmp.eq.s32.totalorder %s17, 0
      %p56 = por %p54, %p55
      %s58 = sadd.s32 %s57, 1
      %p61 = scmp.eq.s32.totalorder %s11, 1
      %p62 = scmp.ne.s32.totalorder %s57, %s59
      %p63 = scmp.eq.s32.totalorder %s11, 0
      %p64 = por %p62, %p63
      %p65 = scmp.ne.s32.totalorder %s57, %s59
      %p66 = scmp.eq.s32.totalorder %s16, 1
      %p67 = por %p65, %p66
      %p68 = scmp.ne.s32.totalorder %s59, %s60
      %p69 = scmp.eq.s32.totalorder %s16, 0
      %p70 = por %p68, %p69
      %p71 = scmp.ne.s32.totalorder %s59, %s60
      %p72 = scmp.eq.s32.totalorder %s17, 1
      %p73 = por %p71, %p72
      %p75 = scmp.ne.s32.totalorder %s60, %s74
      %p76 = scmp.eq.s32.totalorder %s17, 0
      %p77 = por %p75, %p76
      %s78 = ssub.s32 %s18, %s30
      %p79 = scmp.eq.s32.totalorder %s78, 0
      %s81 = sadd.s32 %s80, 1
      %s82 = scalar_select %p79, %s80, %s81
      %p85 = pneg %p79
      %p86 = scmp.eq.s32.totalorder %s11, 1
      %p87 = por %p85, %p86
      %p88 = scmp.ne.s32.totalorder %s80, %s83
      %p89 = scmp.eq.s32.totalorder %s11, 0
      %p90 = por %p88, %p89
      %p91 = scmp.ne.s32.totalorder %s80, %s83
      %p92 = scmp.eq.s32.totalorder %s16, 1
      %p93 = por %p91, %p92
      %p94 = scmp.ne.s32.totalorder %s83, %s84
      %p95 = scmp.eq.s32.totalorder %s16, 0
      %p96 = por %p94, %p95
      %p97 = scmp.ne.s32.totalorder %s83, %s84
      %p98 = scmp.eq.s32.totalorder %s17, 1
      %p99 = por %p97, %p98
      %p101 = scmp.ne.s32.totalorder %s84, %s100
      %p102 = scmp.eq.s32.totalorder %s17, 0
      %p103 = por %p101, %p102
      %p104 = scmp.le.s32.totalorder 1, %s11
      %p105 = scmp.lt.s32.totalorder %s11, 3
      %p106 = pnand %p104, %p105
      %p107 = pneg %p106
      // Predicated region
      $region9: #{tpu_custom_call.1} parent=5 // pred_check
        _
      $region10: #{tpu_custom_call.1} parent=5 // pred_check_branch
        %109 = sbr.rel (%p106) target = $region12
      $region11: #{tpu_custom_call.1} parent=5 // pred_region
        %s110 = ssub.s32 %s11, 1
        // Predicated region
        $region13: #{tpu_custom_call.1} parent=11 // pred_check
          %p111 = pneg %p70
        $region14: #{tpu_custom_call.1} parent=11 // pred_check_branch
          %113 = sbr.rel (%p111) target = $region16
        $region15: #{tpu_custom_call.1} parent=11 // pred_region
          _
        $region16: #{tpu_custom_call.1} parent=11 // pred_fallthru
          _
      $region12: #{tpu_custom_call.1} parent=5 // pred_fallthru
        _
      %p114 = scmp.lt.s32.totalorder %s11, 2
      // Predicated region
      $region17: #{tpu_custom_call.1} parent=5 // pred_check
        %p115 = pneg %p114
      $region18: #{tpu_custom_call.1} parent=5 // pred_check_branch
        %117 = sbr.rel (%p115) target = $region20
      $region19: #{tpu_custom_call.1} parent=5 // pred_region
        // Predicated region
        $region21: #{tpu_custom_call.1} parent=19 // pred_check
          %p118 = pneg %p43
        $region22: #{tpu_custom_call.1} parent=19 // pred_check_branch
          %120 = sbr.rel (%p118) target = $region24
        $region23: #{tpu_custom_call.1} parent=19 // pred_region
          %s121 = smul.u32 16, %s18
          %p122 = scmp.lt.s32.totalorder %s121, 31
          %s123 = scalar_select %p122, %s121, 31
          %s124 = smul.addr %s123, 8
          %s125 = scalar_lea.vmem %s0, %s124
          %s126 = smul.u32 16, %s18
        $region24: #{tpu_custom_call.1} parent=19 // pred_fallthru
          _
      $region20: #{tpu_custom_call.1} parent=5 // pred_fallthru
        _
      %p127 = scmp.le.s32.totalorder 1, %s11
      %p128 = scmp.lt.s32.totalorder %s11, 3
      %p129 = pnand %p127, %p128
      %p130 = pneg %p129
      // Predicated region
      $region25: #{tpu_custom_call.1} parent=5 // pred_check
        _
      $region26: #{tpu_custom_call.1} parent=5 // pred_check_branch
        %132 = sbr.rel (%p129) target = $region28
      $region27: #{tpu_custom_call.1} parent=5 // pred_region
        %s133 = ssub.s32 %s11, 1
        %s134 = smul.u32 16, %s20
        %p135 = scmp.lt.s32.totalorder %s134, 31
        %s136 = scalar_select %p135, %s134, 31
        %s137 = smul.addr %s136, 8
        %s138 = scalar_lea.vmem %s0, %s137
        %p139 = pneg %p49
        %p140 = pneg %p46
        %p141 = pneg %p70
        %p142 = pneg %p67
        %p143 = pneg %p96
        %p144 = pneg %p93
        %s145 = sand.u32 %s83, 1
        %s146 = scalar_lea.sflag [#allocation3], %s145
        %s147 = sand.u32 %s83, 1
        %s148 = scalar_lea.vmem [#allocation2], %s147
        %s149 = smul.u32 16, %s20
        %p150 = scmp.lt.s32.totalorder %s149, 31
        %s151 = scalar_select %p150, %s149, 31
        %s152 = smul.addr %s151, 8
        %s153 = scalar_lea.vmem %s0, %s152
        %s154 = smul.u32 16, %s20
        %p155 = scmp.eq.s32.totalorder %s21, 0
        // Predicated region
        $region29: #{tpu_custom_call.1} parent=27 // pred_check
          %p156 = pneg %p155
        $region30: #{tpu_custom_call.1} parent=27 // pred_check_branch
          %158 = sbr.rel (%p156) target = $region32
        $region31: #{tpu_custom_call.1} parent=27 // pred_region
          %159 = vst [vmem:[%s148] sm:$0x1] 0.0
        $region32: #{tpu_custom_call.1} parent=27 // pred_fallthru
          _
        %v160 = vld [vmem:[%s1] sm:$0xff]
        %v161 = vld [vmem:[%s1 + $0x8] sm:$0xff]
        %v162 = vld [vmem:[%s1 + $0x10] sm:$0xff]
        %v163 = vld [vmem:[%s1 + $0x18] sm:$0xff]
        %v164 = vld [vmem:[%s153] sm:$0xff]
        %v165 = vld [vmem:[%s153 + $0x8] sm:$0xff]
        %v166 = vld [vmem:[%s153 + $0x10] sm:$0xff]
        %v167 = vld [vmem:[%s153 + $0x18] sm:$0xff]
        %v168 = vld [vmem:[%s153 + $0x20] sm:$0xff]
        %v169 = vld [vmem:[%s153 + $0x28] sm:$0xff]
        %v170 = vld [vmem:[%s153 + $0x30] sm:$0xff]
        %v171 = vld [vmem:[%s153 + $0x38] sm:$0xff]
        %v172 = vld [vmem:[%s153 + $0x40] sm:$0xff]
        %v173 = vld [vmem:[%s153 + $0x48] sm:$0xff]
        %v174 = vld [vmem:[%s153 + $0x50] sm:$0xff]
        %v175 = vld [vmem:[%s153 + $0x58] sm:$0xff]
        %v176 = vld [vmem:[%s153 + $0x60] sm:$0xff]
        %v177 = vld [vmem:[%s153 + $0x68] sm:$0xff]
        %v178 = vld [vmem:[%s153 + $0x70] sm:$0xff]
        %v179 = vld [vmem:[%s153 + $0x78] sm:$0xff]
        %vm180 = vcmask 130048
        %v182 = vsel %vm180, %v160, 0
        %v185 = vsel %vm180, %v161, 0
        %v188 = vsel %vm180, %v162, 0
        %v191 = vsel %vm180, %v163, 0
        %v194 = vsel %vm180, %v164, 0
        %v197 = vsel %vm180, %v165, 0
        %v200 = vsel %vm180, %v166, 0
        %v203 = vsel %vm180, %v167, 0
        %v206 = vsel %vm180, %v168, 0
        %v209 = vsel %vm180, %v169, 0
        %v212 = vsel %vm180, %v170, 0
        %v215 = vsel %vm180, %v171, 0
        %v218 = vsel %vm180, %v172, 0
        %v221 = vsel %vm180, %v173, 0
        %v224 = vsel %vm180, %v174, 0
        %v227 = vsel %vm180, %v175, 0
        %v230 = vsel %vm180, %v176, 0
        %v233 = vsel %vm180, %v177, 0
        %v236 = vsel %vm180, %v178, 0
        %v239 = vsel %vm180, %v179, 0
        %241 = vmatprep.subr.mxu0 0.0
        %242 = vmatpush1.xpose.msra.mxu0 %v239
        %243 = vmatprep.subr.mxu0 0.0
        %244 = vmatpush1.xpose.msra.mxu0 %v236
        %245 = vmatprep.subr.mxu0 0.0
        %246 = vmatpush1.xpose.msra.mxu0 %v233
        %247 = vmatprep.subr.mxu0 0.0
        %248 = vmatpush1.xpose.msra.mxu0 %v230
        %249 = vmatprep.subr.mxu0 0.0
        %250 = vmatpush1.xpose.msra.mxu0 %v227
        %251 = vmatprep.subr.mxu0 0.0
        %252 = vmatpush1.xpose.msra.mxu0 %v224
        %253 = vmatprep.subr.mxu0 0.0
        %254 = vmatpush1.xpose.msra.mxu0 %v221
        %255 = vmatprep.subr.mxu0 0.0
        %256 = vmatpush1.xpose.msra.mxu0 %v218
        %257 = vmatprep.subr.mxu0 0.0
        %258 = vmatpush1.xpose.msra.mxu0 %v215
        %259 = vmatprep.subr.mxu0 0.0
        %260 = vmatpush1.xpose.msra.mxu0 %v212
        %261 = vmatprep.subr.mxu0 0.0
        %262 = vmatpush1.xpose.msra.mxu0 %v209
        %263 = vmatprep.subr.mxu0 0.0
        %264 = vmatpush1.xpose.msra.mxu0 %v206
        %265 = vmatprep.subr.mxu0 0.0
        %266 = vmatpush1.xpose.msra.mxu0 %v203
        %267 = vmatprep.subr.mxu0 0.0
        %268 = vmatpush1.xpose.msra.mxu0 %v200
        %269 = vmatprep.subr.mxu0 0.0
        %270 = vmatpush1.xpose.msra.mxu0 %v197
        %271 = vmatprep.subr.mxu0 0.0
        %272 = vmatpush1.xpose.msra.mxu0 %v194
        %273 = vmatprep.subr.mxu0 0.0
        %274 = vmatpush2.xpose.msra.mxu0 0.0
        %275 = vmatprep.subr.mxu0 0.0
        %276 = vmatpush2.xpose.msra.mxu0 0.0
        %277 = vmatprep.subr.mxu0 0.0
        %278 = vmatpush2.xpose.msra.mxu0 0.0
        %279 = vmatprep.subr.mxu0 0.0
        %280 = vmatpush2.xpose.msra.mxu0 0.0
        %281 = vmatprep.subr.mxu0 0.0
        %282 = vmatpush2.xpose.msra.mxu0 0.0
        %283 = vmatprep.subr.mxu0 0.0
        %284 = vmatpush2.xpose.msra.mxu0 0.0
        %285 = vmatprep.subr.mxu0 0.0
        %286 = vmatpush2.xpose.msra.mxu0 0.0
        %287 = vmatprep.subr.mxu0 0.0
        %288 = vmatpush2.xpose.msra.mxu0 0.0
        %289 = vmatprep.subr.mxu0 0.0
        %290 = vmatpush2.xpose.msra.mxu0 0.0
        %291 = vmatprep.subr.mxu0 0.0
        %292 = vmatpush2.xpose.msra.mxu0 0.0
        %293 = vmatprep.subr.mxu0 0.0
        %294 = vmatpush2.xpose.msra.mxu0 0.0
        %295 = vmatprep.subr.mxu0 0.0
        %296 = vmatpush2.xpose.msra.mxu0 0.0
        %297 = vmatprep.subr.mxu0 0.0
        %298 = vmatpush2.xpose.msra.mxu0 0.0
        %299 = vmatprep.subr.mxu0 0.0
        %300 = vmatpush2.xpose.msra.mxu0 0.0
        %301 = vmatprep.subr.mxu0 0.0
        %302 = vmatpush2.xpose.msra.mxu0 0.0
        %303 = vmatprep.subr.mxu0 0.0
        %304 = vmatpush2.xpose.msra.mxu0 0.0
        %305 = vmatprep.mubr.f32.mxu0 0.0
        %306 = vmatmul.mubr.f32.gmra.mxu0 %v182
        %v307 = vpop.f32.mrf.mxu0
        %v308 = vadd.f32 0.0, %v307
        %v309 = vpop.f32.mrf.mxu0
        %310 = vmatprep.mubr.f32.mxu0 0.0
        %311 = vmatmul.mubr.f32.gmra.mxu0 %v185
        %v312 = vpop.f32.mrf.mxu0
        %v313 = vadd.f32 0.0, %v312
        %v314 = vpop.f32.mrf.mxu0
        %315 = vmatprep.mubr.f32.mxu0 0.0
        %316 = vmatmul.mubr.f32.gmra.mxu0 %v188
        %v317 = vpop.f32.mrf.mxu0
        %v318 = vadd.f32 0.0, %v317
        %v319 = vpop.f32.mrf.mxu0
        %320 = vmatprep.mubr.f32.mxu0 0.0
        %321 = vmatmul.mubr.f32.gmra.mxu0 %v191
        %v322 = vpop.f32.mrf.mxu0
        %v323 = vadd.f32 0.0, %v322
        %v324 = vpop.f32.mrf.mxu0
        %325 = vdwg.mxu0
        %v326 = vtanh.pop %v308
        %v327 = vtanh.pop %v313
        %v328 = vtanh.pop %v318
        %v329 = vtanh.pop %v323
        %v330 = vld [vmem:[%s148] sm:$0x1]
        %v331 = vadd.f32 %v326, %v327
        %v332 = vadd.f32 %v331, %v328
        %v333 = vadd.f32 %v332, %v329
        %v334 = vrot.slane %v333, 4
        %v335 = vadd.f32 %v333, %v334
        %v336 = vrot.slane %v335, 2
        %v337 = vadd.f32 %v335, %v336
        %v338 = vrot.slane %v337, 1
        %v339 = vadd.f32 %v337, %v338
        %v340 = vmul.f32 %v339, 0.03125
        %v341 = vadd.f32 %v330, %v340
        %342 = vst [vmem:[%s148] sm:$0x1] %v341
        %s343 = sand.u32 %s83, 1
        %s344 = scalar_lea.sflag [#allocation3], %s343
        %s345 = sand.u32 %s83, 1
        %s346 = scalar_lea.vmem [#allocation2], %s345
        // Predicated region
        $region33: #{tpu_custom_call.1} parent=27 // pred_check
          %p347 = pneg %p93
        $region34: #{tpu_custom_call.1} parent=27 // pred_check_branch
          %349 = sbr.rel (%p347) target = $region36
        $region35: #{tpu_custom_call.1} parent=27 // pred_region
          %s351 = ssub.s32 16, 16
          %352 = vsyncadd %s344, %s351
          %s353 = smul.addr %s20, 16
          %s354 = scalar_lea.hbm %s2, %s353
          %s356 = sshll.u32 %s346, 4
          %s357 = int_to_ptr.vmem [resolvable:$true] %s356
          %359 = dma.vmem_to_hbm [thread:$0]  %s357, 16, %s354, %s344
        $region36: #{tpu_custom_call.1} parent=27 // pred_fallthru
          _
      $region28: #{tpu_custom_call.1} parent=5 // pred_fallthru
        _
      %p360 = scmp.le.s32.totalorder 2, %s11
      // Predicated region
      $region37: #{tpu_custom_call.1} parent=5 // pred_check
        %p361 = pneg %p360
      $region38: #{tpu_custom_call.1} parent=5 // pred_check_branch
        %363 = sbr.rel (%p361) target = $region40
      $region39: #{tpu_custom_call.1} parent=5 // pred_region
        %s364 = ssub.s32 %s11, 2
        // Predicated region
        $region41: #{tpu_custom_call.1} parent=39 // pred_check
          %p365 = pneg %p99
        $region42: #{tpu_custom_call.1} parent=39 // pred_check_branch
          %367 = sbr.rel (%p365) target = $region44
        $region43: #{tpu_custom_call.1} parent=39 // pred_region
          %s368 = sand.u32 %s84, 1
          %s369 = scalar_lea.sflag [#allocation3], %s368
          %s370 = sand.u32 %s84, 1
          %s371 = scalar_lea.vmem [#allocation2], %s370
          %372 = dma.done %s369, 16
        $region44: #{tpu_custom_call.1} parent=39 // pred_fallthru
          _
      $region40: #{tpu_custom_call.1} parent=5 // pred_fallthru
        _
    $region6: #{tpu_custom_call.1} parent=1 // loop_footer
      %s15 = sadd.s32 1, %s11
    $region7: #{tpu_custom_call.1} parent=1 // loop_footer_branch
      %10 = sbr.rel target = $region3
    $region8: #{tpu_custom_call.1} parent=1 // loop_exit
      _
    %373 = vsyncpa [#allocation3], 1
    %s374 = scalar_lea.sflag [#allocation3], 1
    %375 = vsyncpa %s374, 1

</llo_original>
